<compile_context>
chip_gen: v6e
topology: v6e:2x2x1
jax: 0.10.0
libtpu: 0.0.40
codegen_flags: <defaults>
</compile_context>

<pallas_src>
import functools

import jax
import jax.numpy as jnp
from jax.experimental import pallas as pl
from jax.experimental.pallas import tpu as pltpu


def mlp_head_kernel(x_ref, w1_ref, b1_ref, w2_ref, o_ref, *, n_tokens, d_in):
    # x_ref : (TB, n_tokens*d_in) bf16   -- streamed / double-buffered
    # w1_ref: (d_in, H) f32 (pre-scaled by 1/n_tokens) -- VMEM resident
    # b1_ref: (1, H) f32,  w2_ref: (1, H) f32
    # o_ref : (1, 1, TB) f32             -- lane-dense output row
    #
    # Token sum via static lane slices (VALU only; no cross-sublane reduce).
    # Accumulate in f32 (v5e has no bf16 VPU); 1/N is folded into w1.
    xs = x_ref[:, 0:d_in].astype(jnp.float32)
    for n in range(1, n_tokens):
        xs = xs + x_ref[:, n * d_in:(n + 1) * d_in].astype(jnp.float32)

    # fc[0]: Linear(in_dim, 128)  (MXU, f32 accumulate)
    h = jnp.dot(xs, w1_ref[...], preferred_element_type=jnp.float32) + b1_ref[...]
    # fc[1]: Dropout(p=0.1) -- identity at inference time.
    # TODO(synk): training-mode stochastic dropout (pltpu.prng_*) not emitted.
    # fc[2]: ReLU
    h = jnp.maximum(h, 0.0)
    # fc[3]: Linear(128, 1, bias=False): VPU multiply + lane reduction.
    out = jnp.sum(h * w2_ref[...], axis=-1)                    # (TB,)
    # fc[4]: Tanh, stored lane-dense.
    o_ref[...] = jnp.tanh(out)[None, None, :]


def _round_up(x, m):
    return ((x + m - 1) // m) * m


def _vmem_capacity_bytes():
    """Generation-aware VMEM capacity (v5e/v6e: 128 MiB, v7x: 64 MiB)."""
    try:
        info = pltpu.get_tpu_info()
        for attr in ("vmem_capacity_bytes", "vmem_bytes"):
            v = getattr(info, attr, None)
            if v:
                return int(v)
    except Exception:
        pass
    return 64 * 1024 * 1024  # conservative fallback (v7x)


# Sublane alignment that satisfies both f32 (8,128) and bf16 (16,128) tiling.
_ROW_ALIGN = 16


def _choose_tiling(B, n_tokens, d_in, hidden, x_bytes):
    """Pick (block_b, num_tiles, vmem_limit_bytes).

    The kernel is HBM-streaming bound on x, so we want the largest batch tile
    the VMEM budget allows (fewer grid steps -> less fixed ~0.35us per-step
    overhead), while (a) balancing tiles so padded rows stay tiny and
    (b) keeping >= 2 (even) tiles for large B so v7x's two TensorCores both
    get work from the "parallel" batch axis.
    """
    nd = n_tokens * d_in
    cap = _vmem_capacity_bytes()

    # Per-row VMEM cost: double-buffered streamed x row + f32 intermediates
    # (xs and h) with 2x slack for compiler temporaries.
    per_row = 2 * nd * x_bytes + 2 * 4 * (d_in + hidden)
    # Resident weights (count 2x for pipeline buffers) + fixed headroom.
    fixed = 2 * 4 * (d_in * hidden + 2 * hidden) + (1 << 20)

    budget = int(cap * 0.55)
    tb_max = max(_ROW_ALIGN,
                 ((budget - fixed) // per_row) // _ROW_ALIGN * _ROW_ALIGN)

    num_tiles = pl.cdiv(B, tb_max)
    if B >= 4 * _ROW_ALIGN:
        num_tiles = max(num_tiles, 2)        # use both TCs on v7x megacore
    if num_tiles > 1 and num_tiles % 2 == 1:
        num_tiles += 1                       # even tile count -> balanced cores
    block_b = _round_up(pl.cdiv(B, num_tiles), _ROW_ALIGN)

    needed = (2 * block_b * nd * x_bytes          # double-buffered x slab
              + 2 * 4 * block_b * (d_in + hidden)  # f32 intermediates (slack)
              + 2 * 4 * block_b                   # double-buffered output row
              + fixed)
    vmem_limit = int(min(0.9 * cap,
                         max(32 * 1024 * 1024, needed * 1.25 + (2 << 20))))
    return block_b, num_tiles, vmem_limit


def mlp_forward(x, w1, b1, w2, *, stream_dtype=jnp.bfloat16):
    """x: (B, N, D) f32; w1: (D, H); b1: (1, H) or (H,); w2: (H, 1).

    Returns {'pred': (B, 1) float32}, matching MLP.forward for the
    'survival' head.
    """
    B, N, D = x.shape
    H = w1.shape[1]
    x_bytes = jnp.dtype(stream_dtype).itemsize

    block_b, num_tiles, vmem_limit = _choose_tiling(B, N, D, H, x_bytes)
    Bp = num_tiles * block_b

    # Flatten tokens into the lane dimension (contiguous, free reshape) and
    # stream x in bf16 to halve HBM bytes (the roofline for this kernel).
    x2d = x.reshape(B, N * D).astype(stream_dtype)
    if Bp != B:
        x2d = jnp.pad(x2d, ((0, Bp - B), (0, 0)))

    # Fold the mean's 1/N into W1 so the kernel only needs the token sum.
    w1_scaled = (w1 * (1.0 / N)).astype(jnp.float32)
    b1_row = b1.reshape(1, H).astype(jnp.float32)
    w2_row = w2.reshape(1, H).astype(jnp.float32)

    kernel = functools.partial(mlp_head_kernel, n_tokens=N, d_in=D)

    cost = pl.CostEstimate(
        flops=Bp * (N - 1) * D + 2 * Bp * D * H + 4 * Bp * H,
        transcendentals=Bp,                                    # tanh
        bytes_accessed=Bp * N * D * x_bytes + D * H * 4 + 2 * H * 4 + Bp * 4,
    )

    out = pl.pallas_call(
        kernel,
        out_shape=jax.ShapeDtypeStruct((num_tiles, 1, block_b), jnp.float32),
        grid=(num_tiles,),
        in_specs=[
            pl.BlockSpec((block_b, N * D), lambda i: (i, 0)),   # pipelined x tiles
            pl.BlockSpec((D, H), lambda i: (0, 0)),             # VMEM-resident weights
            pl.BlockSpec((1, H), lambda i: (0, 0)),
            pl.BlockSpec((1, H), lambda i: (0, 0)),
        ],
        # 3-D output so the block's last-two dims are (1 == full extent, TB ==
        # full extent): satisfies the (8,128) rule on every TPU generation.
        out_specs=pl.BlockSpec((1, 1, block_b), lambda i: (i, 0, 0)),
        compiler_params=pltpu.CompilerParams(
            dimension_semantics=("parallel",),                  # v7x megacore
            vmem_limit_bytes=vmem_limit,
        ),
        cost_estimate=cost,
    )(x2d, w1_scaled, b1_row, w2_row)

    # Drop the padded (garbage) rows, reshape to (B, 1).
    pred = out.reshape(-1)[:B].reshape(B, 1)
    return {'pred': pred}


def reference_forward(x, w1, b1, w2):
    xm = jnp.mean(x, axis=1)
    h = jnp.maximum(xm @ w1 + b1, 0.0)
    return jnp.tanh(h @ w2)


def _make_params(key, D, H):
    k_w1, k_b1, k_w2 = jax.random.split(key, 3)
    w1 = jax.random.uniform(k_w1, (D, H), dtype=jnp.float32,
                            minval=-1.0 / jnp.sqrt(D), maxval=1.0 / jnp.sqrt(D))
    b1 = jax.random.uniform(k_b1, (1, H), dtype=jnp.float32,
                            minval=-1.0 / jnp.sqrt(D), maxval=1.0 / jnp.sqrt(D))
    w2 = jax.random.uniform(k_w2, (H, 1), dtype=jnp.float32,
                            minval=-1.0 / jnp.sqrt(H), maxval=1.0 / jnp.sqrt(H))
    return w1, b1, w2


if __name__ == "__main__":
    key = jax.random.PRNGKey(0)
    k_x, k_p, k_x2 = jax.random.split(key, 3)

    # Small shapes consistent with HybridModel: feature_dim=512, ppi=8 patches
    # averaged per sample, hidden=128, survival head -> (B, 1).
    B, N, D, H = 2, 8, 512, 128
    w1, b1, w2 = _make_params(k_p, D, H)

    # Tolerance is loosened vs the f32 reference because x is streamed in
    # bf16 (the accumulation / matmul still run in f32).
    ATOL = RTOL = 2e-2

    x = jax.random.normal(k_x, (B, N, D), dtype=jnp.float32)
    out = mlp_forward(x, w1, b1, w2)
    pred = jax.block_until_ready(out['pred'])
    ref = reference_forward(x, w1, b1, w2)
    assert pred.shape == (B, 1), pred.shape
    assert jnp.allclose(pred, ref, atol=ATOL, rtol=RTOL), (pred, ref)

    # Second check: larger batch exercises the multi-tile (balanced) grid,
    # padding removal, megacore-parallel axis and the lane-dense output path.
    B2 = 300
    x2 = jax.random.normal(k_x2, (B2, N, D), dtype=jnp.float32)
    out2 = mlp_forward(x2, w1, b1, w2)
    pred2 = jax.block_until_ready(out2['pred'])
    ref2 = reference_forward(x2, w1, b1, w2)
    assert pred2.shape == (B2, 1), pred2.shape
    assert jnp.allclose(pred2, ref2, atol=ATOL, rtol=RTOL)

    print("KERNEL_OK")
</pallas_src>

<mosaic_0001>
module attributes {stable_mosaic.version = 11 : i64} {
  func.func @mlp_head_kernel(%arg0: i32, %arg1: memref<16x4096xbf16, #tpu.memory_space<vmem>>, %arg2: memref<512x128xf32, #tpu.memory_space<vmem>>, %arg3: memref<1x128xf32, #tpu.memory_space<vmem>>, %arg4: memref<1x128xf32, #tpu.memory_space<vmem>>, %arg5: memref<1x1x16xf32, #tpu.memory_space<vmem>>) attributes {dimension_semantics = [#tpu.dimension_semantics<parallel>], iteration_bounds = array<i64: 1>, scalar_prefetch = 0 : i64, scratch_operands = 0 : i64, tpu.core_type = #tpu.core_type<tc>, window_params = [{transform_indices = @transform_0, window_bounds = array<i64: 16, 4096>}, {pipeline_mode = #tpu.pipeline_mode<synchronous>, transform_indices = @transform_1, window_bounds = array<i64: 512, 128>}, {pipeline_mode = #tpu.pipeline_mode<synchronous>, transform_indices = @transform_2, window_bounds = array<i64: 1, 128>}, {pipeline_mode = #tpu.pipeline_mode<synchronous>, transform_indices = @transform_3, window_bounds = array<i64: 1, 128>}, {transform_indices = @transform_4, window_bounds = array<i64: 1, 1, 16>}]} {
    %c0 = arith.constant 0 : index
    %c0_0 = arith.constant 0 : index
    %0 = vector.load %arg1[%c0, %c0_0] : memref<16x4096xbf16, #tpu.memory_space<vmem>>, vector<16x512xbf16>
    %1 = arith.extf %0 : vector<16x512xbf16> to vector<16x512xf32>
    %c0_1 = arith.constant 0 : index
    %c512 = arith.constant 512 : index
    %2 = vector.load %arg1[%c0_1, %c512] : memref<16x4096xbf16, #tpu.memory_space<vmem>>, vector<16x512xbf16>
    %3 = arith.extf %2 : vector<16x512xbf16> to vector<16x512xf32>
    %4 = arith.addf %1, %3 : vector<16x512xf32>
    %c0_2 = arith.constant 0 : index
    %c1024 = arith.constant 1024 : index
    %5 = vector.load %arg1[%c0_2, %c1024] : memref<16x4096xbf16, #tpu.memory_space<vmem>>, vector<16x512xbf16>
    %6 = arith.extf %5 : vector<16x512xbf16> to vector<16x512xf32>
    %7 = arith.addf %4, %6 : vector<16x512xf32>
    %c0_3 = arith.constant 0 : index
    %c1536 = arith.constant 1536 : index
    %8 = vector.load %arg1[%c0_3, %c1536] : memref<16x4096xbf16, #tpu.memory_space<vmem>>, vector<16x512xbf16>
    %9 = arith.extf %8 : vector<16x512xbf16> to vector<16x512xf32>
    %10 = arith.addf %7, %9 : vector<16x512xf32>
    %c0_4 = arith.constant 0 : index
    %c2048 = arith.constant 2048 : index
    %11 = vector.load %arg1[%c0_4, %c2048] : memref<16x4096xbf16, #tpu.memory_space<vmem>>, vector<16x512xbf16>
    %12 = arith.extf %11 : vector<16x512xbf16> to vector<16x512xf32>
    %13 = arith.addf %10, %12 : vector<16x512xf32>
    %c0_5 = arith.constant 0 : index
    %c2560 = arith.constant 2560 : index
    %14 = vector.load %arg1[%c0_5, %c2560] : memref<16x4096xbf16, #tpu.memory_space<vmem>>, vector<16x512xbf16>
    %15 = arith.extf %14 : vector<16x512xbf16> to vector<16x512xf32>
    %16 = arith.addf %13, %15 : vector<16x512xf32>
    %c0_6 = arith.constant 0 : index
    %c3072 = arith.constant 3072 : index
    %17 = vector.load %arg1[%c0_6, %c3072] : memref<16x4096xbf16, #tpu.memory_space<vmem>>, vector<16x512xbf16>
    %18 = arith.extf %17 : vector<16x512xbf16> to vector<16x512xf32>
    %19 = arith.addf %16, %18 : vector<16x512xf32>
    %c0_7 = arith.constant 0 : index
    %c3584 = arith.constant 3584 : index
    %20 = vector.load %arg1[%c0_7, %c3584] : memref<16x4096xbf16, #tpu.memory_space<vmem>>, vector<16x512xbf16>
    %21 = arith.extf %20 : vector<16x512xbf16> to vector<16x512xf32>
    %22 = arith.addf %19, %21 : vector<16x512xf32>
    %c0_8 = arith.constant 0 : index
    %c0_9 = arith.constant 0 : index
    %23 = vector.load %arg2[%c0_8, %c0_9] : memref<512x128xf32, #tpu.memory_space<vmem>>, vector<512x128xf32>
    %cst = arith.constant dense<0.000000e+00> : vector<16x128xf32>
    %24 = tpu.matmul %22, %23, %cst {dimension_numbers = #tpu.dot_dimension_numbers<[1], [0], [0], [1], [0, 0, 1, 1], [], []>} : vector<16x512xf32>, vector<512x128xf32>, vector<16x128xf32> -> vector<16x128xf32>
    %c0_10 = arith.constant 0 : index
    %c0_11 = arith.constant 0 : index
    %25 = vector.load %arg3[%c0_10, %c0_11] : memref<1x128xf32, #tpu.memory_space<vmem>>, vector<1x128xf32>
    %26 = vector.broadcast %25 : vector<1x128xf32> to vector<16x128xf32>
    %27 = arith.addf %24, %26 : vector<16x128xf32>
    %cst_12 = arith.constant 0.000000e+00 : f32
    %28 = vector.broadcast %cst_12 : f32 to vector<16x128xf32>
    %29 = arith.maximumf %27, %28 : vector<16x128xf32>
    %c0_13 = arith.constant 0 : index
    %c0_14 = arith.constant 0 : index
    %30 = vector.load %arg4[%c0_13, %c0_14] : memref<1x128xf32, #tpu.memory_space<vmem>>, vector<1x128xf32>
    %31 = vector.broadcast %30 : vector<1x128xf32> to vector<16x128xf32>
    %32 = arith.mulf %29, %31 : vector<16x128xf32>
    %cst_15 = arith.constant dense<0.000000e+00> : vector<16xf32>
    %33 = vector.multi_reduction <add>, %32, %cst_15 [1] : vector<16x128xf32> to vector<16xf32>
    %34 = math.tanh %33 : vector<16xf32>
    %35 = vector.shape_cast %34 : vector<16xf32> to vector<1x1x16xf32>
    %c0_16 = arith.constant 0 : index
    %c0_17 = arith.constant 0 : index
    %c0_18 = arith.constant 0 : index
    %36 = vector.load %arg5[%c0_16, %c0_17, %c0_18] : memref<1x1x16xf32, #tpu.memory_space<vmem>>, vector<1x1x16xf32>
    tpu.vector_store %arg5[%c0_16, %c0_17, %c0_18], %35 {strides = array<i32>} : memref<1x1x16xf32, #tpu.memory_space<vmem>>, vector<1x1x16xf32>,
    return
  }
  func.func @transform_0(%arg0: i32) -> (i32, i32) {
    %c0_i32 = arith.constant 0 : i32
    %c0_i32_0 = arith.constant 0 : i32
    return %arg0, %c0_i32 : i32, i32
  }
  func.func @transform_1(%arg0: i32) -> (i32, i32) {
    %c0_i32 = arith.constant 0 : i32
    %c0_i32_0 = arith.constant 0 : i32
    %c0_i32_1 = arith.constant 0 : i32
    return %c0_i32, %c0_i32_0 : i32, i32
  }
  func.func @transform_2(%arg0: i32) -> (i32, i32) {
    %c0_i32 = arith.constant 0 : i32
    %c0_i32_0 = arith.constant 0 : i32
    %c0_i32_1 = arith.constant 0 : i32
    return %c0_i32, %c0_i32_0 : i32, i32
  }
  func.func @transform_3(%arg0: i32) -> (i32, i32) {
    %c0_i32 = arith.constant 0 : i32
    %c0_i32_0 = arith.constant 0 : i32
    %c0_i32_1 = arith.constant 0 : i32
    return %c0_i32, %c0_i32_0 : i32, i32
  }
  func.func @transform_4(%arg0: i32) -> (i32, i32, i32) {
    %c0_i32 = arith.constant 0 : i32
    %c0_i32_0 = arith.constant 0 : i32
    %c0_i32_1 = arith.constant 0 : i32
    return %arg0, %c0_i32, %c0_i32_0 : i32, i32, i32
  }
}

</mosaic_0001>

<llo_original>
// kernel: tpu_custom_call.1
$region0: #{tpu_custom_call.1}
  #allocation0 [shape = 'u32[]', space=smem, size = 0x4, offset = 0x4, fixed_abs, tag = 'smem constant byte address 0x4 - core index']
  #allocation1 [shape = 'u32[144,128]{1,0:T(1,128)}', space=vmem, size = 0x12000, scoped, tag = 'internal scratch']
  %s0 = inlined_call_operand.hbm [shape: bf16[16,4096], index: 0, kind: input, shape index: {}]
  %s1 = inlined_call_operand.hbm [shape: f32[512,128], index: 1, kind: input, shape index: {}]
  %s2 = inlined_call_operand.vmem [shape: f32[1,128], index: 2, kind: input, shape index: {}]
  %s3 = inlined_call_operand.vmem [shape: f32[1,128], index: 3, kind: input, shape index: {}]
  %s4 = inlined_call_operand.hbm [shape: f32[1,1,16], index: 4, kind: output, shape index: {}]
  %s5 = sld [smem:[#allocation0]]
  $region34: #{tpu_custom_call.1} parent=0
    _
  %s7 = ssub.s32 1, %s5
  %s8 = scalar_select 0, %s7, %s5
  $region1: #{tpu_custom_call.1} parent=0
    #allocation2 [shape = 'u8[131072]{0}', space=vmem, size = 0x20000, scoped, tag = 'input window, operand 0, single buffered']
    #allocation3 [shape = 's32[1]{0}', space=sflag, size = 0x4, scoped, tag = 'scoped memory for tpu_custom_call.1']
    #allocation4 [shape = 's32[1]{0}', space=sflag, size = 0x4, scoped, tag = 'scoped memory for tpu_custom_call.1']
    #allocation5 [shape = 'u8[262144]{0}', space=vmem, size = 0x40000, scoped, tag = 'input window, operand 1, single buffered']
    #allocation6 [shape = 's32[1]{0}', space=sflag, size = 0x4, scoped, tag = 'scoped memory for tpu_custom_call.1']
    #allocation7 [shape = 'u8[512]{0}', space=vmem, size = 0x400, scoped, tag = 'output window, operand 0, single buffered']
    %9 = vsyncpa [#allocation3], 0
    %10 = vsyncpa [#allocation6], 0
    %11 = vsyncpa [#allocation4], 0
    // Predicated region
    $region2: #{tpu_custom_call.1} parent=1 // pred_check
      _
    $region3: #{tpu_custom_call.1} parent=1 // pred_check_branch
      %13 = sbr.rel (0) target = $region5
    $region4: #{tpu_custom_call.1} parent=1 // pred_region
      %s15 = ssub.s32 4096, 4096
      %16 = vsyncadd [#allocation3], %s15
      %s17 = sshll.u32 [#allocation2], 4
      %s18 = int_to_ptr.vmem [resolvable:$true] %s17
      %23 = dma.hbm_to_vmem [thread:$0]  %s0, 4096, %s18, [#allocation3], 2048, 2048, 128
    $region5: #{tpu_custom_call.1} parent=1 // pred_fallthru
      _
    // Predicated region
    $region6: #{tpu_custom_call.1} parent=1 // pred_check
      _
    $region7: #{tpu_custom_call.1} parent=1 // pred_check_branch
      %25 = sbr.rel (0) target = $region9
    $region8: #{tpu_custom_call.1} parent=1 // pred_region
      %s27 = ssub.s32 8192, 8192
      %28 = vsyncadd [#allocation6], %s27
      %s29 = sshll.u32 [#allocation5], 4
      %s30 = int_to_ptr.vmem [resolvable:$true] %s29
      %35 = dma.hbm_to_vmem [thread:$0]  %s1, 8192, %s30, [#allocation6], 128, 128, 8
    $region9: #{tpu_custom_call.1} parent=1 // pred_fallthru
      _
    // Predicated region
    $region10: #{tpu_custom_call.1} parent=1 // pred_check
      _
    $region11: #{tpu_custom_call.1} parent=1 // pred_check_branch
      %37 = sbr.rel (0) target = $region13
    $region12: #{tpu_custom_call.1} parent=1 // pred_region
      _
    $region13: #{tpu_custom_call.1} parent=1 // pred_fallthru
      _
    // Predicated region
    $region14: #{tpu_custom_call.1} parent=1 // pred_check
      _
    $region15: #{tpu_custom_call.1} parent=1 // pred_check_branch
      %39 = sbr.rel (0) target = $region17
    $region16: #{tpu_custom_call.1} parent=1 // pred_region
      _
    $region17: #{tpu_custom_call.1} parent=1 // pred_fallthru
      _
    // Predicated region
    $region18: #{tpu_custom_call.1} parent=1 // pred_check
      _
    $region19: #{tpu_custom_call.1} parent=1 // pred_check_branch
      %41 = sbr.rel (0) target = $region21
    $region20: #{tpu_custom_call.1} parent=1 // pred_region
      %42 = dma.done [#allocation3], 4096
    $region21: #{tpu_custom_call.1} parent=1 // pred_fallthru
      _
    // Predicated region
    $region22: #{tpu_custom_call.1} parent=1 // pred_check
      _
    $region23: #{tpu_custom_call.1} parent=1 // pred_check_branch
      %44 = sbr.rel (0) target = $region25
    $region24: #{tpu_custom_call.1} parent=1 // pred_region
      %45 = dma.done [#allocation6], 8192
    $region25: #{tpu_custom_call.1} parent=1 // pred_fallthru
      _
    %v46 = vld [vmem:[#allocation2] sm:$0xff]
    %v47 = vld [vmem:[#allocation2 + $0x8] sm:$0xff]
    %v48 = vld [vmem:[#allocation2 + $0x80] sm:$0xff]
    %v49 = vld [vmem:[#allocation2 + $0x88] sm:$0xff]
    %v50 = vunpack.c.l.bf16 %v46
    %v51 = vunpack.c.h.bf16 %v46
    %v52 = vunpack.c.l.bf16 %v47
    %v53 = vunpack.c.h.bf16 %v47
    %v54 = vunpack.c.l.bf16 %v48
    %v55 = vunpack.c.h.bf16 %v48
    %v56 = vunpack.c.l.bf16 %v49
    %v57 = vunpack.c.h.bf16 %v49
    %v58 = vld [vmem:[#allocation2 + $0x10] sm:$0xff]
    %v59 = vld [vmem:[#allocation2 + $0x18] sm:$0xff]
    %v60 = vld [vmem:[#allocation2 + $0x90] sm:$0xff]
    %v61 = vld [vmem:[#allocation2 + $0x98] sm:$0xff]
    %v62 = vunpack.c.l.bf16 %v58
    %v63 = vunpack.c.h.bf16 %v58
    %v64 = vunpack.c.l.bf16 %v59
    %v65 = vunpack.c.h.bf16 %v59
    %v66 = vunpack.c.l.bf16 %v60
    %v67 = vunpack.c.h.bf16 %v60
    %v68 = vunpack.c.l.bf16 %v61
    %v69 = vunpack.c.h.bf16 %v61
    %v70 = vadd.f32 %v50, %v62
    %v71 = vadd.f32 %v51, %v63
    %v72 = vadd.f32 %v52, %v64
    %v73 = vadd.f32 %v53, %v65
    %v74 = vadd.f32 %v54, %v66
    %v75 = vadd.f32 %v55, %v67
    %v76 = vadd.f32 %v56, %v68
    %v77 = vadd.f32 %v57, %v69
    %v78 = vld [vmem:[#allocation2 + $0x20] sm:$0xff]
    %v79 = vld [vmem:[#allocation2 + $0x28] sm:$0xff]
    %v80 = vld [vmem:[#allocation2 + $0xa0] sm:$0xff]
    %v81 = vld [vmem:[#allocation2 + $0xa8] sm:$0xff]
    %v82 = vunpack.c.l.bf16 %v78
    %v83 = vunpack.c.h.bf16 %v78
    %v84 = vunpack.c.l.bf16 %v79
    %v85 = vunpack.c.h.bf16 %v79
    %v86 = vunpack.c.l.bf16 %v80
    %v87 = vunpack.c.h.bf16 %v80
    %v88 = vunpack.c.l.bf16 %v81
    %v89 = vunpack.c.h.bf16 %v81
    %v90 = vadd.f32 %v70, %v82
    %v91 = vadd.f32 %v71, %v83
    %v92 = vadd.f32 %v72, %v84
    %v93 = vadd.f32 %v73, %v85
    %v94 = vadd.f32 %v74, %v86
    %v95 = vadd.f32 %v75, %v87
    %v96 = vadd.f32 %v76, %v88
    %v97 = vadd.f32 %v77, %v89
    %v98 = vld [vmem:[#allocation2 + $0x30] sm:$0xff]
    %v99 = vld [vmem:[#allocation2 + $0x38] sm:$0xff]
    %v100 = vld [vmem:[#allocation2 + $0xb0] sm:$0xff]
    %v101 = vld [vmem:[#allocation2 + $0xb8] sm:$0xff]
    %v102 = vunpack.c.l.bf16 %v98
    %v103 = vunpack.c.h.bf16 %v98
    %v104 = vunpack.c.l.bf16 %v99
    %v105 = vunpack.c.h.bf16 %v99
    %v106 = vunpack.c.l.bf16 %v100
    %v107 = vunpack.c.h.bf16 %v100
    %v108 = vunpack.c.l.bf16 %v101
    %v109 = vunpack.c.h.bf16 %v101
    %v110 = vadd.f32 %v90, %v102
    %v111 = vadd.f32 %v91, %v103
    %v112 = vadd.f32 %v92, %v104
    %v113 = vadd.f32 %v93, %v105
    %v114 = vadd.f32 %v94, %v106
    %v115 = vadd.f32 %v95, %v107
    %v116 = vadd.f32 %v96, %v108
    %v117 = vadd.f32 %v97, %v109
    %v118 = vld [vmem:[#allocation2 + $0x40] sm:$0xff]
    %v119 = vld [vmem:[#allocation2 + $0x48] sm:$0xff]
    %v120 = vld [vmem:[#allocation2 + $0xc0] sm:$0xff]
    %v121 = vld [vmem:[#allocation2 + $0xc8] sm:$0xff]
    %v122 = vunpack.c.l.bf16 %v118
    %v123 = vunpack.c.h.bf16 %v118
    %v124 = vunpack.c.l.bf16 %v119
    %v125 = vunpack.c.h.bf16 %v119
    %v126 = vunpack.c.l.bf16 %v120
    %v127 = vunpack.c.h.bf16 %v120
    %v128 = vunpack.c.l.bf16 %v121
    %v129 = vunpack.c.h.bf16 %v121
    %v130 = vadd.f32 %v110, %v122
    %v131 = vadd.f32 %v111, %v123
    %v132 = vadd.f32 %v112, %v124
    %v133 = vadd.f32 %v113, %v125
    %v134 = vadd.f32 %v114, %v126
    %v135 = vadd.f32 %v115, %v127
    %v136 = vadd.f32 %v116, %v128
    %v137 = vadd.f32 %v117, %v129
    %v138 = vld [vmem:[#allocation2 + $0x50] sm:$0xff]
    %v139 = vld [vmem:[#allocation2 + $0x58] sm:$0xff]
    %v140 = vld [vmem:[#allocation2 + $0xd0] sm:$0xff]
    %v141 = vld [vmem:[#allocation2 + $0xd8] sm:$0xff]
    %v142 = vunpack.c.l.bf16 %v138
    %v143 = vunpack.c.h.bf16 %v138
    %v144 = vunpack.c.l.bf16 %v139
    %v145 = vunpack.c.h.bf16 %v139
    %v146 = vunpack.c.l.bf16 %v140
    %v147 = vunpack.c.h.bf16 %v140
    %v148 = vunpack.c.l.bf16 %v141
    %v149 = vunpack.c.h.bf16 %v141
    %v150 = vadd.f32 %v130, %v142
    %v151 = vadd.f32 %v131, %v143
    %v152 = vadd.f32 %v132, %v144
    %v153 = vadd.f32 %v133, %v145
    %v154 = vadd.f32 %v134, %v146
    %v155 = vadd.f32 %v135, %v147
    %v156 = vadd.f32 %v136, %v148
    %v157 = vadd.f32 %v137, %v149
    %v158 = vld [vmem:[#allocation2 + $0x60] sm:$0xff]
    %v159 = vld [vmem:[#allocation2 + $0x68] sm:$0xff]
    %v160 = vld [vmem:[#allocation2 + $0xe0] sm:$0xff]
    %v161 = vld [vmem:[#allocation2 + $0xe8] sm:$0xff]
    %v162 = vunpack.c.l.bf16 %v158
    %v163 = vunpack.c.h.bf16 %v158
    %v164 = vunpack.c.l.bf16 %v159
    %v165 = vunpack.c.h.bf16 %v159
    %v166 = vunpack.c.l.bf16 %v160
    %v167 = vunpack.c.h.bf16 %v160
    %v168 = vunpack.c.l.bf16 %v161
    %v169 = vunpack.c.h.bf16 %v161
    %v170 = vadd.f32 %v150, %v162
    %v171 = vadd.f32 %v151, %v163
    %v172 = vadd.f32 %v152, %v164
    %v173 = vadd.f32 %v153, %v165
    %v174 = vadd.f32 %v154, %v166
    %v175 = vadd.f32 %v155, %v167
    %v176 = vadd.f32 %v156, %v168
    %v177 = vadd.f32 %v157, %v169
    %v178 = vld [vmem:[#allocation2 + $0x70] sm:$0xff]
    %v179 = vld [vmem:[#allocation2 + $0x78] sm:$0xff]
    %v180 = vld [vmem:[#allocation2 + $0xf0] sm:$0xff]
    %v181 = vld [vmem:[#allocation2 + $0xf8] sm:$0xff]
    %v182 = vunpack.c.l.bf16 %v178
    %v183 = vunpack.c.h.bf16 %v178
    %v184 = vunpack.c.l.bf16 %v179
    %v185 = vunpack.c.h.bf16 %v179
    %v186 = vunpack.c.l.bf16 %v180
    %v187 = vunpack.c.h.bf16 %v180
    %v188 = vunpack.c.l.bf16 %v181
    %v189 = vunpack.c.h.bf16 %v181
    %v190 = vadd.f32 %v170, %v182
    %v191 = vadd.f32 %v171, %v183
    %v192 = vadd.f32 %v172, %v184
    %v193 = vadd.f32 %v173, %v185
    %v194 = vadd.f32 %v174, %v186
    %v195 = vadd.f32 %v175, %v187
    %v196 = vadd.f32 %v176, %v188
    %v197 = vadd.f32 %v177, %v189
    %v198 = vld [vmem:[#allocation5] sm:$0xff]
    %v199 = vld [vmem:[#allocation5 + $0x8] sm:$0xff]
    %v200 = vld [vmem:[#allocation5 + $0x10] sm:$0xff]
    %v201 = vld [vmem:[#allocation5 + $0x18] sm:$0xff]
    %v202 = vld [vmem:[#allocation5 + $0x20] sm:$0xff]
    %v203 = vld [vmem:[#allocation5 + $0x28] sm:$0xff]
    %v204 = vld [vmem:[#allocation5 + $0x30] sm:$0xff]
    %v205 = vld [vmem:[#allocation5 + $0x38] sm:$0xff]
    %v206 = vld [vmem:[#allocation5 + $0x40] sm:$0xff]
    %v207 = vld [vmem:[#allocation5 + $0x48] sm:$0xff]
    %v208 = vld [vmem:[#allocation5 + $0x50] sm:$0xff]
    %v209 = vld [vmem:[#allocation5 + $0x58] sm:$0xff]
    %v210 = vld [vmem:[#allocation5 + $0x60] sm:$0xff]
    %v211 = vld [vmem:[#allocation5 + $0x68] sm:$0xff]
    %v212 = vld [vmem:[#allocation5 + $0x70] sm:$0xff]
    %v213 = vld [vmem:[#allocation5 + $0x78] sm:$0xff]
    %v214 = vld [vmem:[#allocation5 + $0x80] sm:$0xff]
    %v215 = vld [vmem:[#allocation5 + $0x88] sm:$0xff]
    %v216 = vld [vmem:[#allocation5 + $0x90] sm:$0xff]
    %v217 = vld [vmem:[#allocation5 + $0x98] sm:$0xff]
    %v218 = vld [vmem:[#allocation5 + $0xa0] sm:$0xff]
    %v219 = vld [vmem:[#allocation5 + $0xa8] sm:$0xff]
    %v220 = vld [vmem:[#allocation5 + $0xb0] sm:$0xff]
    %v221 = vld [vmem:[#allocation5 + $0xb8] sm:$0xff]
    %v222 = vld [vmem:[#allocation5 + $0xc0] sm:$0xff]
    %v223 = vld [vmem:[#allocation5 + $0xc8] sm:$0xff]
    %v224 = vld [vmem:[#allocation5 + $0xd0] sm:$0xff]
    %v225 = vld [vmem:[#allocation5 + $0xd8] sm:$0xff]
    %v226 = vld [vmem:[#allocation5 + $0xe0] sm:$0xff]
    %v227 = vld [vmem:[#allocation5 + $0xe8] sm:$0xff]
    %v228 = vld [vmem:[#allocation5 + $0xf0] sm:$0xff]
    %v229 = vld [vmem:[#allocation5 + $0xf8] sm:$0xff]
    %v230 = vld [vmem:[#allocation5 + $0x100] sm:$0xff]
    %v231 = vld [vmem:[#allocation5 + $0x108] sm:$0xff]
    %v232 = vld [vmem:[#allocation5 + $0x110] sm:$0xff]
    %v233 = vld [vmem:[#allocation5 + $0x118] sm:$0xff]
    %v234 = vld [vmem:[#allocation5 + $0x120] sm:$0xff]
    %v235 = vld [vmem:[#allocation5 + $0x128] sm:$0xff]
    %v236 = vld [vmem:[#allocation5 + $0x130] sm:$0xff]
    %v237 = vld [vmem:[#allocation5 + $0x138] sm:$0xff]
    %v238 = vld [vmem:[#allocation5 + $0x140] sm:$0xff]
    %v239 = vld [vmem:[#allocation5 + $0x148] sm:$0xff]
    %v240 = vld [vmem:[#allocation5 + $0x150] sm:$0xff]
    %v241 = vld [vmem:[#allocation5 + $0x158] sm:$0xff]
    %v242 = vld [vmem:[#allocation5 + $0x160] sm:$0xff]
    %v243 = vld [vmem:[#allocation5 + $0x168] sm:$0xff]
    %v244 = vld [vmem:[#allocation5 + $0x170] sm:$0xff]
    %v245 = vld [vmem:[#allocation5 + $0x178] sm:$0xff]
    %v246 = vld [vmem:[#allocation5 + $0x180] sm:$0xff]
    %v247 = vld [vmem:[#allocation5 + $0x188] sm:$0xff]
    %v248 = vld [vmem:[#allocation5 + $0x190] sm:$0xff]
    %v249 = vld [vmem:[#allocation5 + $0x198] sm:$0xff]
    %v250 = vld [vmem:[#allocation5 + $0x1a0] sm:$0xff]
    %v251 = vld [vmem:[#allocation5 + $0x1a8] sm:$0xff]
    %v252 = vld [vmem:[#allocation5 + $0x1b0] sm:$0xff]
    %v253 = vld [vmem:[#allocation5 + $0x1b8] sm:$0xff]
    %v254 = vld [vmem:[#allocation5 + $0x1c0] sm:$0xff]
    %v255 = vld [vmem:[#allocation5 + $0x1c8] sm:$0xff]
    %v256 = vld [vmem:[#allocation5 + $0x1d0] sm:$0xff]
    %v257 = vld [vmem:[#allocation5 + $0x1d8] sm:$0xff]
    %v258 = vld [vmem:[#allocation5 + $0x1e0] sm:$0xff]
    %v259 = vld [vmem:[#allocation5 + $0x1e8] sm:$0xff]
    %v260 = vld [vmem:[#allocation5 + $0x1f0] sm:$0xff]
    %v261 = vld [vmem:[#allocation5 + $0x1f8] sm:$0xff]
    %v262 = vld [vmem:[%s2] sm:$0x1]
    %v264 = vlaneseq
    %v265 = vshrl.u32 %v264, 7
    %v266 = vsub.s32 0, %v265
    %v267 = vrot.slane %v262, %v266
    %269 = vmatprep.subr.mxu0 0.0
    %270 = vmatpush1.msra.mxu0 %v213
    %271 = vmatprep.subr.mxu0 0.0
    %272 = vmatpush1.msra.mxu0 %v212
    %273 = vmatprep.subr.mxu0 0.0
    %274 = vmatpush1.msra.mxu0 %v211
    %275 = vmatprep.subr.mxu0 0.0
    %276 = vmatpush1.msra.mxu0 %v210
    %277 = vmatprep.subr.mxu0 0.0
    %278 = vmatpush1.msra.mxu0 %v209
    %279 = vmatprep.subr.mxu0 0.0
    %280 = vmatpush1.msra.mxu0 %v208
    %281 = vmatprep.subr.mxu0 0.0
    %282 = vmatpush1.msra.mxu0 %v207
    %283 = vmatprep.subr.mxu0 0.0
    %284 = vmatpush1.msra.mxu0 %v206
    %285 = vmatprep.subr.mxu0 0.0
    %286 = vmatpush1.msra.mxu0 %v205
    %287 = vmatprep.subr.mxu0 0.0
    %288 = vmatpush1.msra.mxu0 %v204
    %289 = vmatprep.subr.mxu0 0.0
    %290 = vmatpush1.msra.mxu0 %v203
    %291 = vmatprep.subr.mxu0 0.0
    %292 = vmatpush1.msra.mxu0 %v202
    %293 = vmatprep.subr.mxu0 0.0
    %294 = vmatpush1.msra.mxu0 %v201
    %295 = vmatprep.subr.mxu0 0.0
    %296 = vmatpush1.msra.mxu0 %v200
    %297 = vmatprep.subr.mxu0 0.0
    %298 = vmatpush1.msra.mxu0 %v199
    %299 = vmatprep.subr.mxu0 0.0
    %300 = vmatpush1.msra.mxu0 %v198
    %301 = vmatprep.subr.mxu0 0.0
    %302 = vmatpush2.msra.mxu0 %v229
    %303 = vmatprep.subr.mxu0 0.0
    %304 = vmatpush2.msra.mxu0 %v228
    %305 = vmatprep.subr.mxu0 0.0
    %306 = vmatpush2.msra.mxu0 %v227
    %307 = vmatprep.subr.mxu0 0.0
    %308 = vmatpush2.msra.mxu0 %v226
    %309 = vmatprep.subr.mxu0 0.0
    %310 = vmatpush2.msra.mxu0 %v225
    %311 = vmatprep.subr.mxu0 0.0
    %312 = vmatpush2.msra.mxu0 %v224
    %313 = vmatprep.subr.mxu0 0.0
    %314 = vmatpush2.msra.mxu0 %v223
    %315 = vmatprep.subr.mxu0 0.0
    %316 = vmatpush2.msra.mxu0 %v222
    %317 = vmatprep.subr.mxu0 0.0
    %318 = vmatpush2.msra.mxu0 %v221
    %319 = vmatprep.subr.mxu0 0.0
    %320 = vmatpush2.msra.mxu0 %v220
    %321 = vmatprep.subr.mxu0 0.0
    %322 = vmatpush2.msra.mxu0 %v219
    %323 = vmatprep.subr.mxu0 0.0
    %324 = vmatpush2.msra.mxu0 %v218
    %325 = vmatprep.subr.mxu0 0.0
    %326 = vmatpush2.msra.mxu0 %v217
    %327 = vmatprep.subr.mxu0 0.0
    %328 = vmatpush2.msra.mxu0 %v216
    %329 = vmatprep.subr.mxu0 0.0
    %330 = vmatpush2.msra.mxu0 %v215
    %331 = vmatprep.subr.mxu0 0.0
    %332 = vmatpush2.msra.mxu0 %v214
    %333 = vmatprep.mubr.f32.mxu0 %v191
    %334 = vmatmul.mubr.f32.gmra.mxu0 %v190
    %v335 = vpop.f32.mrf.mxu0
    %v336 = vadd.f32 %v267, %v335
    %v337 = vpop.f32.mrf.mxu0
    %338 = vmatprep.mubr.f32.mxu0 %v195
    %339 = vmatmul.mubr.f32.gmra.mxu0 %v194
    %v340 = vpop.f32.mrf.mxu0
    %v341 = vadd.f32 %v267, %v340
    %v342 = vpop.f32.mrf.mxu0
    %343 = vdwg.mxu0
    %344 = vmatprep.subr.mxu0 0.0
    %345 = vmatpush1.msra.mxu0 %v245
    %346 = vmatprep.subr.mxu0 0.0
    %347 = vmatpush1.msra.mxu0 %v244
    %348 = vmatprep.subr.mxu0 0.0
    %349 = vmatpush1.msra.mxu0 %v243
    %350 = vmatprep.subr.mxu0 0.0
    %351 = vmatpush1.msra.mxu0 %v242
    %352 = vmatprep.subr.mxu0 0.0
    %353 = vmatpush1.msra.mxu0 %v241
    %354 = vmatprep.subr.mxu0 0.0
    %355 = vmatpush1.msra.mxu0 %v240
    %356 = vmatprep.subr.mxu0 0.0
    %357 = vmatpush1.msra.mxu0 %v239
    %358 = vmatprep.subr.mxu0 0.0
    %359 = vmatpush1.msra.mxu0 %v238
    %360 = vmatprep.subr.mxu0 0.0
    %361 = vmatpush1.msra.mxu0 %v237
    %362 = vmatprep.subr.mxu0 0.0
    %363 = vmatpush1.msra.mxu0 %v236
    %364 = vmatprep.subr.mxu0 0.0
    %365 = vmatpush1.msra.mxu0 %v235
    %366 = vmatprep.subr.mxu0 0.0
    %367 = vmatpush1.msra.mxu0 %v234
    %368 = vmatprep.subr.mxu0 0.0
    %369 = vmatpush1.msra.mxu0 %v233
    %370 = vmatprep.subr.mxu0 0.0
    %371 = vmatpush1.msra.mxu0 %v232
    %372 = vmatprep.subr.mxu0 0.0
    %373 = vmatpush1.msra.mxu0 %v231
    %374 = vmatprep.subr.mxu0 0.0
    %375 = vmatpush1.msra.mxu0 %v230
    %376 = vmatprep.subr.mxu0 0.0
    %377 = vmatpush2.msra.mxu0 %v261
    %378 = vmatprep.subr.mxu0 0.0
    %379 = vmatpush2.msra.mxu0 %v260
    %380 = vmatprep.subr.mxu0 0.0
    %381 = vmatpush2.msra.mxu0 %v259
    %382 = vmatprep.subr.mxu0 0.0
    %383 = vmatpush2.msra.mxu0 %v258
    %384 = vmatprep.subr.mxu0 0.0
    %385 = vmatpush2.msra.mxu0 %v257
    %386 = vmatprep.subr.mxu0 0.0
    %387 = vmatpush2.msra.mxu0 %v256
    %388 = vmatprep.subr.mxu0 0.0
    %389 = vmatpush2.msra.mxu0 %v255
    %390 = vmatprep.subr.mxu0 0.0
    %391 = vmatpush2.msra.mxu0 %v254
    %392 = vmatprep.subr.mxu0 0.0
    %393 = vmatpush2.msra.mxu0 %v253
    %394 = vmatprep.subr.mxu0 0.0
    %395 = vmatpush2.msra.mxu0 %v252
    %396 = vmatprep.subr.mxu0 0.0
    %397 = vmatpush2.msra.mxu0 %v251
    %398 = vmatprep.subr.mxu0 0.0
    %399 = vmatpush2.msra.mxu0 %v250
    %400 = vmatprep.subr.mxu0 0.0
    %401 = vmatpush2.msra.mxu0 %v249
    %402 = vmatprep.subr.mxu0 0.0
    %403 = vmatpush2.msra.mxu0 %v248
    %404 = vmatprep.subr.mxu0 0.0
    %405 = vmatpush2.msra.mxu0 %v247
    %406 = vmatprep.subr.mxu0 0.0
    %407 = vmatpush2.msra.mxu0 %v246
    %408 = vmatprep.mubr.f32.mxu0 %v193
    %409 = vmatmul.mubr.f32.gmra.mxu0 %v192
    %v410 = vpop.f32.mrf.mxu0
    %v411 = vadd.f32 %v336, %v410
    %v412 = vpop.f32.mrf.mxu0
    %413 = vmatprep.mubr.f32.mxu0 %v197
    %414 = vmatmul.mubr.f32.gmra.mxu0 %v196
    %v415 = vpop.f32.mrf.mxu0
    %v416 = vadd.f32 %v341, %v415
    %v417 = vpop.f32.mrf.mxu0
    %418 = vdwg.mxu0
    %v419 = vmax.f32 %v411, 0.0
    %v420 = vmax.f32 %v416, 0.0
    %v421 = vld [vmem:[%s3] sm:$0x1]
    %v423 = vlaneseq
    %v424 = vshrl.u32 %v423, 7
    %v425 = vsub.s32 0, %v424
    %v426 = vrot.slane %v421, %v425
    %v428 = vmul.f32 %v419, %v426
    %v429 = vmul.f32 %v420, %v426
    %430 = vadd.xlane.f32.xlu0 %v428
    %v431 = vpop.xlane.xlu0 %430
    %432 = vadd.xlane.f32.xlu0 %v429
    %v433 = vpop.xlane.xlu0 %432
    %v434 = vtanh.pop %v431
    %v435 = vtanh.pop %v433
    %v438 = vlaneseq
    %v439 = vand.u32 %v438, 127
    %v440 = vlaneseq
    %v441 = vshrl.u32 %v440, 7
    %v442 = vsub.s32 %v439, %v441
    %v443 = vrot.slane %v434, %v442
    %v444 = vadd.s32 %v439, 4294967288
    %v445 = vlaneseq
    %v446 = vshrl.u32 %v445, 7
    %v447 = vsub.s32 %v444, %v446
    %v448 = vrot.slane %v435, %v447
    %vm449 = vcmask 130112
    %v450 = vsel %vm449, %v448, %v443
    %vm452 = vcmask 122880
    %453 = vst.msk [vmem:[#allocation7] sm:$0x1] %vm452, %v450
    // Predicated region
    $region26: #{tpu_custom_call.1} parent=1 // pred_check
      _
    $region27: #{tpu_custom_call.1} parent=1 // pred_check_branch
      %455 = sbr.rel (0) target = $region29
    $region28: #{tpu_custom_call.1} parent=1 // pred_region
      %s457 = ssub.s32 16, 16
      %458 = vsyncadd [#allocation4], %s457
      %s460 = sshll.u32 [#allocation7], 4
      %s461 = int_to_ptr.vmem [resolvable:$true] %s460
      %463 = dma.vmem_to_hbm [thread:$0]  %s461, 16, %s4, [#allocation4]
    $region29: #{tpu_custom_call.1} parent=1 // pred_fallthru
      _
    // Predicated region
    $region30: #{tpu_custom_call.1} parent=1 // pred_check
      _
    $region31: #{tpu_custom_call.1} parent=1 // pred_check_branch
      %465 = sbr.rel (0) target = $region33
    $region32: #{tpu_custom_call.1} parent=1 // pred_region
      %466 = dma.done [#allocation4], 16
    $region33: #{tpu_custom_call.1} parent=1 // pred_fallthru
      _
    %467 = vsyncpa [#allocation3], 1
    %468 = vsyncpa [#allocation6], 1
    %469 = vsyncpa [#allocation4], 1

</llo_original>
